<compile_context>
chip_gen: v6e
topology: v6e:2x2x1
jax: 0.10.0
libtpu: 0.0.40
codegen_flags: <defaults>
</compile_context>

<pallas_src>
import math
import functools

import jax
import jax.numpy as jnp
from jax import lax
from jax.experimental import pallas as pl
from jax.experimental.pallas import tpu as pltpu

_MIB = 1024 * 1024

# x @ W.T with W stored PyTorch-style [out_features, in_features]: contract the last dim
# of both operands -- the MXU consumes this orientation natively, no transpose needed.
_XWT_DIMS = (((1,), (1,)), ((), ()))


def _padded_tile_bytes(shape, dtype):
    """VMEM bytes for one buffer of `shape`, honoring (sublane, lane) tile padding."""
    itemsize = jnp.dtype(dtype).itemsize
    dims = list(shape)
    if dims:
        dims[-1] = -(-int(dims[-1]) // 128) * 128                   # lane dim pads to 128
    if len(dims) >= 2:
        sub = {4: 8, 2: 16, 1: 32}.get(itemsize, 8)                 # sublane pad per dtype
        dims[-2] = -(-int(dims[-2]) // sub) * sub
    n = 1
    for d in dims:
        n *= int(d)
    return n * itemsize


def _vmem_capacity_bytes():
    try:
        return int(pltpu.get_tpu_info().vmem_capacity_bytes)
    except Exception:
        return 64 * _MIB          # conservative fallback (v7x per-TensorCore VMEM)


def _vmem_budget():
    cap = _vmem_capacity_bytes()
    # Generation-aware ceiling: ~56 MiB on v7x (64 MiB VMEM), <=100 MiB on v5e/v6e.
    return max(min(cap - 8 * _MIB, 100 * _MIB), 24 * _MIB)


def _vmem_limit(estimate_bytes):
    return int(min(_vmem_budget(), max(32 * _MIB, int(estimate_bytes * 1.25))))


# --------------------------------------------------------------------------------------
# Row-tiled linear kernel: y = x @ W.T + b   (W: [Dout, Din], PyTorch layout)
# --------------------------------------------------------------------------------------
def _linear_kernel(x_ref, w_ref, b_ref, o_ref):
    # Operands arrive pre-cast to the compute dtype (bf16 on v6e/v7x for full MXU rate),
    # so there are no per-step casts here; accumulation stays f32.
    y = lax.dot_general(x_ref[...], w_ref[...], _XWT_DIMS,
                        preferred_element_type=jnp.float32)
    o_ref[...] = (y + b_ref[...]).astype(o_ref.dtype)


def _linear(x2d, w, b, *, out_dtype, compute_dtype):
    """(N, Din) @ W.T + b -> (N, Dout), tiled over rows."""
    N, Din = x2d.shape
    Dout = w.shape[0]

    rb = N
    for cand in (512, 256, 128, 64, 32, 16, 8):
        if cand <= N and N % cand == 0:
            rb = cand
            break

    cd = jnp.dtype(compute_dtype)
    x_c = x2d if x2d.dtype == cd else x2d.astype(cd)          # cast once in the wrapper
    w_c = w if w.dtype == cd else w.astype(cd)                # (not per grid step)
    b_c = jnp.reshape(b, (1, Dout)).astype(jnp.float32)       # bias add stays f32

    est = (2 * _padded_tile_bytes((rb, Din), cd)
           + 2 * _padded_tile_bytes((Dout, Din), cd)
           + 2 * _padded_tile_bytes((1, Dout), jnp.float32)
           + 2 * _padded_tile_bytes((rb, Dout), out_dtype))

    return pl.pallas_call(
        _linear_kernel,
        out_shape=jax.ShapeDtypeStruct((N, Dout), out_dtype),
        grid=(N // rb,),
        in_specs=[
            pl.BlockSpec((rb, Din), lambda i: (i, 0)),
            # Constant index_map -> weight/bias fetched once, resident across the grid.
            # TODO(synk): pipeline_mode=pl.Buffered(1) would also drop the never-refilled
            # second weight buffer once single-buffered constant blocks are verified.
            pl.BlockSpec((Dout, Din), lambda i: (0, 0)),
            pl.BlockSpec((1, Dout), lambda i: (0, 0)),
        ],
        out_specs=pl.BlockSpec((rb, Dout), lambda i: (i, 0)),
        compiler_params=pltpu.CompilerParams(
            dimension_semantics=("parallel",),
            vmem_limit_bytes=_vmem_limit(est),
        ),
    )(x_c, w_c, b_c)


# --------------------------------------------------------------------------------------
# Attention core kernel: one grid step == (one batch element, one q-tile), all heads.
# --------------------------------------------------------------------------------------
def _attention_kernel(q_ref, k_ref, v_ref, ctx_ref, *rest, scale, compute_dtype,
                      return_attn, approx_recip):
    """q_ref: (1,H,TQ,hd); k_ref/v_ref: (1,H,Lk,hd); ctx_ref: (1,H,TQ,hd);
    rest = (attn_ref (1,H,TQ,Lk),) iff return_attn.  Inputs are already projected,
    head-major and pre-cast to compute_dtype -> zero per-head relayouts in here."""
    cd = compute_dtype
    # Fold 1/sqrt(head_dim) into Q once: O(H*TQ*hd) instead of O(H*TQ*Lk).
    qh = (q_ref[0] * scale).astype(cd)
    kh = k_ref[0]
    vh = v_ref[0]

    # Scores for all heads at once: (H,TQ,hd) x (H,Lk,hd) -> (H,TQ,Lk), f32 accumulation.
    scores = jnp.einsum("hqd,hkd->hqk", qh, kh, preferred_element_type=jnp.float32)
    # TODO(synk): optional padding mask (mask==0 -> -1e10) not plumbed; module default mask=None.
    scores = scores - jnp.max(scores, axis=-1, keepdims=True)
    # Softmax stays f32 (v5e VPU/EUP have no bf16 path; keeps numerics close on all gens).
    # TODO(synk): bf16 exp would ~2x the EUP-bound softmax on v6e/v7x when head_dim is small.
    p = jnp.exp(scores)
    p = p * pl.reciprocal(jnp.sum(p, axis=-1, keepdims=True), approx=approx_recip)
    # TODO(synk): nn.Dropout on attention weights is identity in eval mode; not applied here.

    if return_attn:
        rest[0][0] = p.astype(rest[0].dtype)     # one (H, TQ, Lk) slab store per step

    # Context for all heads: (H,TQ,Lk) x (H,Lk,hd) -> (H,TQ,hd).
    ctx = jnp.einsum("hqk,hkd->hqd", p.astype(cd), vh, preferred_element_type=jnp.float32)
    ctx_ref[0] = ctx.astype(ctx_ref.dtype)


def multi_head_attention(query, key, value, params, *, num_heads,
                         q_block=None, compute_dtype=jnp.bfloat16,
                         return_attn=True, attn_dtype=jnp.float32,
                         approx_recip=None, vmem_limit_bytes=None):
    """query: [B, Lq, D], key/value: [B, Lk, D]; params hold PyTorch-layout weights.

    Returns (output [B, Lq, D], attn [B, H, Lq, Lk]) like the nn.Module.  In production
    prefer return_attn=False (skips the HBM-heavy attention-weights writeback) and/or
    attn_dtype=jnp.bfloat16.  compute_dtype controls MXU operand dtype only (softmax and
    accumulation stay f32); pass jnp.float32 to bit-match the PyTorch reference.
    """
    B, Lq, D = query.shape
    Lk = key.shape[1]
    H = num_heads
    assert D % H == 0, "model_dim must be divisible by num_heads"
    hd = D // H
    cd = jnp.dtype(compute_dtype)
    if approx_recip is None:
        approx_recip = cd != jnp.dtype(jnp.float32)

    wq, bq, wk, bk, wv, bv, wo, bo = (
        params["wq"], params["bq"], params["wk"], params["bk"],
        params["wv"], params["bv"], params["wo"], params["bo"],
    )

    # ---- Q/K/V projections as row-tiled Pallas linears, hoisted out of the attention
    # kernel: raw K/V never sit in attention VMEM next to projected copies and the
    # q-tile axis carries no scratch state. ----
    qp = _linear(query.reshape(B * Lq, D), wq, bq, out_dtype=cd, compute_dtype=cd)
    kp = _linear(key.reshape(B * Lk, D), wk, bk, out_dtype=cd, compute_dtype=cd)
    vp = _linear(value.reshape(B * Lk, D), wv, bv, out_dtype=cd, compute_dtype=cd)

    # Head split is pure layout: XLA reshape/transpose between the kernels replaces the
    # per-head slice/stack loops (no in-kernel XLU relayouts at all).
    q_heads = qp.reshape(B, Lq, H, hd).transpose(0, 2, 1, 3)
    k_heads = kp.reshape(B, Lk, H, hd).transpose(0, 2, 1, 3)
    v_heads = vp.reshape(B, Lk, H, hd).transpose(0, 2, 1, 3)

    # ---- q-tile size: biggest tile whose per-step footprint (double-buffered blocks +
    # f32 scores/p intermediates + attn-weights block) fits the generation's VMEM. ----
    def step_bytes(qb):
        est = 2 * _padded_tile_bytes((H, qb, hd), cd)               # Q block (x2 buffers)
        est += 2 * 2 * _padded_tile_bytes((H, Lk, hd), cd)          # K + V blocks
        est += 2 * _padded_tile_bytes((H, qb, hd), cd)              # ctx out block
        est += 2 * _padded_tile_bytes((H, qb, Lk), jnp.float32)     # scores + p
        if return_attn:
            est += 2 * _padded_tile_bytes((H, qb, Lk), attn_dtype)  # attn out block
        return est

    budget = _vmem_budget()
    min_qb = 16 if cd.itemsize == 2 else 8
    if q_block is None:
        q_block = Lq
        for cand in (512, 256, 128, 64, 32, 16):
            if cand <= Lq and Lq % cand == 0:
                q_block = cand
                break
        while (q_block > min_qb and step_bytes(q_block) > budget
               and q_block % 2 == 0 and Lq % (q_block // 2) == 0):
            q_block //= 2
    assert Lq % q_block == 0, "q_block must divide the query length"
    assert q_block == Lq or q_block % 8 == 0, "q_block must be a multiple of 8"
    nq = Lq // q_block

    if vmem_limit_bytes is None:
        vmem_limit_bytes = _vmem_limit(step_bytes(q_block))

    out_shape = [jax.ShapeDtypeStruct((B, H, Lq, hd), cd)]
    out_specs = [pl.BlockSpec((1, H, q_block, hd), lambda b, i: (b, 0, i, 0))]
    if return_attn:
        out_shape.append(jax.ShapeDtypeStruct((B, H, Lq, Lk), attn_dtype))
        out_specs.append(pl.BlockSpec((1, H, q_block, Lk), lambda b, i: (b, 0, i, 0)))

    kernel = functools.partial(
        _attention_kernel, scale=1.0 / math.sqrt(hd), compute_dtype=cd,
        return_attn=return_attn, approx_recip=bool(approx_recip))

    results = pl.pallas_call(
        kernel,
        out_shape=tuple(out_shape),
        grid=(B, nq),
        in_specs=[
            pl.BlockSpec((1, H, q_block, hd), lambda b, i: (b, 0, i, 0)),  # Q tile
            pl.BlockSpec((1, H, Lk, hd), lambda b, i: (b, 0, 0, 0)),       # K (resident per b)
            pl.BlockSpec((1, H, Lk, hd), lambda b, i: (b, 0, 0, 0)),       # V (resident per b)
        ],
        out_specs=tuple(out_specs),
        compiler_params=pltpu.CompilerParams(
            # No scratch-carried state across q-tiles -> both axes parallel
            # (lets both v7x TensorCores work even at B == 1).
            dimension_semantics=("parallel", "parallel"),
            vmem_limit_bytes=int(vmem_limit_bytes),
        ),
    )(q_heads, k_heads, v_heads)
    # TODO(synk): for return_attn=False and long Lk, add a KV-tiled online-softmax (flash)
    # variant so the (H, q_block, Lk) scores/p intermediates never materialize.

    ctx_heads = results[0]
    attn = results[1] if return_attn else None

    # combine_heads is again pure layout (XLA), then the output projection reuses the
    # same Pallas linear kernel.
    context = ctx_heads.transpose(0, 2, 1, 3).reshape(B * Lq, D)
    out = _linear(context, wo, bo, out_dtype=query.dtype, compute_dtype=cd)
    out = out.reshape(B, Lq, D)

    if return_attn:
        return out, attn
    return out


# --------------------------------------------------------------------------------------
# Parameter init + pure-JAX reference (mirrors the PyTorch forward, eval mode, mask=None)
# --------------------------------------------------------------------------------------
def _xavier_uniform(key, shape, dtype=jnp.float32):
    fan_in, fan_out = shape[1], shape[0]
    limit = math.sqrt(6.0 / (fan_in + fan_out))
    return jax.random.uniform(key, shape, dtype=dtype, minval=-limit, maxval=limit)


def _make_params(key, model_dim):
    ks = jax.random.split(key, 8)
    D = model_dim
    bias_limit = 1.0 / math.sqrt(D)

    def bias(k):
        return jax.random.uniform(k, (1, D), dtype=jnp.float32,
                                  minval=-bias_limit, maxval=bias_limit)

    return {
        "wq": _xavier_uniform(ks[0], (D, D)), "bq": bias(ks[1]),
        "wk": _xavier_uniform(ks[2], (D, D)), "bk": bias(ks[3]),
        "wv": _xavier_uniform(ks[4], (D, D)), "bv": bias(ks[5]),
        "wo": _xavier_uniform(ks[6], (D, D)), "bo": bias(ks[7]),
    }


def _reference(query, key, value, params, num_heads):
    B, Lq, D = query.shape
    Lk = key.shape[1]
    hd = D // num_heads

    def proj(x, w, b):
        return x @ w.T + b

    def split(x, L):
        return x.reshape(B, L, num_heads, hd).transpose(0, 2, 1, 3)

    q = split(proj(query, params["wq"], params["bq"]), Lq)
    k = split(proj(key, params["wk"], params["bk"]), Lk)
    v = split(proj(value, params["wv"], params["bv"]), Lk)

    scores = jnp.einsum("bhqd,bhkd->bhqk", q, k) / math.sqrt(hd)
    attn = jax.nn.softmax(scores, axis=-1)
    ctx = jnp.einsum("bhqk,bhkd->bhqd", attn, v)
    ctx = ctx.transpose(0, 2, 1, 3).reshape(B, Lq, D)
    out = ctx @ params["wo"].T + params["bo"]
    return out, attn


if __name__ == "__main__":
    B, Lq, Lk, D, H = 2, 16, 16, 64, 4

    root = jax.random.PRNGKey(0)
    k_q, k_k, k_v, k_p = jax.random.split(root, 4)
    query = jax.random.normal(k_q, (B, Lq, D), dtype=jnp.float32)
    key = jax.random.normal(k_k, (B, Lk, D), dtype=jnp.float32)
    value = jax.random.normal(k_v, (B, Lk, D), dtype=jnp.float32)
    params = _make_params(k_p, D)

    out_ref, attn_ref = _reference(query, key, value, params, H)

    # 1) Exact-numerics path (f32 MXU operands, exact reciprocal); q_block=8 exercises
    #    the Lq-tiled grid (2 q-tiles per batch element).
    out, attn = multi_head_attention(query, key, value, params, num_heads=H,
                                     q_block=8, compute_dtype=jnp.float32,
                                     approx_recip=False)
    out = jax.block_until_ready(out)
    attn = jax.block_until_ready(attn)
    assert jnp.allclose(out, out_ref, atol=1e-4, rtol=1e-4), "output mismatch (f32)"
    assert jnp.allclose(attn, attn_ref, atol=1e-5, rtol=1e-4), "attn mismatch (f32)"

    # 2) Production path: bf16 MXU operands (default), f32 softmax/accumulation,
    #    approx reciprocal; looser tolerances.
    out_bf, attn_bf = multi_head_attention(query, key, value, params, num_heads=H)
    out_bf = jax.block_until_ready(out_bf)
    attn_bf = jax.block_until_ready(attn_bf)
    assert jnp.allclose(out_bf, out_ref, atol=1e-1, rtol=1e-1), "output mismatch (bf16)"
    assert jnp.allclose(attn_bf, attn_ref, atol=5e-2, rtol=5e-2), "attn mismatch (bf16)"

    print("KERNEL_OK")
</pallas_src>

<mosaic_0001>
module attributes {stable_mosaic.version = 11 : i64} {
  func.func @_linear_kernel(%arg0: i32, %arg1: memref<32x64xf32, #tpu.memory_space<vmem>>, %arg2: memref<64x64xf32, #tpu.memory_space<vmem>>, %arg3: memref<1x64xf32, #tpu.memory_space<vmem>>, %arg4: memref<32x64xf32, #tpu.memory_space<vmem>>) attributes {dimension_semantics = [#tpu.dimension_semantics<parallel>], iteration_bounds = array<i64: 1>, scalar_prefetch = 0 : i64, scratch_operands = 0 : i64, tpu.core_type = #tpu.core_type<tc>, window_params = [{transform_indices = @transform_0, window_bounds = array<i64: 32, 64>}, {pipeline_mode = #tpu.pipeline_mode<synchronous>, transform_indices = @transform_1, window_bounds = array<i64: 64, 64>}, {pipeline_mode = #tpu.pipeline_mode<synchronous>, transform_indices = @transform_2, window_bounds = array<i64: 1, 64>}, {transform_indices = @transform_3, window_bounds = array<i64: 32, 64>}]} {
    %c0 = arith.constant 0 : index
    %c0_0 = arith.constant 0 : index
    %0 = vector.load %arg1[%c0, %c0_0] : memref<32x64xf32, #tpu.memory_space<vmem>>, vector<32x64xf32>
    %c0_1 = arith.constant 0 : index
    %c0_2 = arith.constant 0 : index
    %1 = vector.load %arg2[%c0_1, %c0_2] : memref<64x64xf32, #tpu.memory_space<vmem>>, vector<64x64xf32>
    %cst = arith.constant dense<0.000000e+00> : vector<32x64xf32>
    %2 = tpu.matmul %0, %1, %cst {dimension_numbers = #tpu.dot_dimension_numbers<[1], [1], [0], [0], [0, 0, 1, 0], [], []>} : vector<32x64xf32>, vector<64x64xf32>, vector<32x64xf32> -> vector<32x64xf32>
    %c0_3 = arith.constant 0 : index
    %c0_4 = arith.constant 0 : index
    %3 = vector.load %arg3[%c0_3, %c0_4] : memref<1x64xf32, #tpu.memory_space<vmem>>, vector<1x64xf32>
    %4 = vector.broadcast %3 : vector<1x64xf32> to vector<32x64xf32>
    %5 = arith.addf %2, %4 : vector<32x64xf32>
    %c0_5 = arith.constant 0 : index
    %c0_6 = arith.constant 0 : index
    %6 = vector.load %arg4[%c0_5, %c0_6] : memref<32x64xf32, #tpu.memory_space<vmem>>, vector<32x64xf32>
    tpu.vector_store %arg4[%c0_5, %c0_6], %5 {strides = array<i32>} : memref<32x64xf32, #tpu.memory_space<vmem>>, vector<32x64xf32>,
    return
  }
  func.func @transform_0(%arg0: i32) -> (i32, i32) {
    %c0_i32 = arith.constant 0 : i32
    %c0_i32_0 = arith.constant 0 : i32
    return %arg0, %c0_i32 : i32, i32
  }
  func.func @transform_1(%arg0: i32) -> (i32, i32) {
    %c0_i32 = arith.constant 0 : i32
    %c0_i32_0 = arith.constant 0 : i32
    %c0_i32_1 = arith.constant 0 : i32
    return %c0_i32, %c0_i32_0 : i32, i32
  }
  func.func @transform_2(%arg0: i32) -> (i32, i32) {
    %c0_i32 = arith.constant 0 : i32
    %c0_i32_0 = arith.constant 0 : i32
    %c0_i32_1 = arith.constant 0 : i32
    return %c0_i32, %c0_i32_0 : i32, i32
  }
  func.func @transform_3(%arg0: i32) -> (i32, i32) {
    %c0_i32 = arith.constant 0 : i32
    %c0_i32_0 = arith.constant 0 : i32
    return %arg0, %c0_i32 : i32, i32
  }
}

</mosaic_0001>

<llo_original>
// kernel: tpu_custom_call.1
$region0: #{tpu_custom_call.1}
  #allocation0 [shape = 'u32[]', space=smem, size = 0x4, offset = 0x4, fixed_abs, tag = 'smem constant byte address 0x4 - core index']
  #allocation1 [shape = 'u32[144,128]{1,0:T(1,128)}', space=vmem, size = 0x12000, scoped, tag = 'internal scratch']
  %s0 = inlined_call_operand.hbm [shape: f32[32,64], index: 0, kind: input, shape index: {}]
  %s1 = inlined_call_operand.hbm [shape: f32[64,64], index: 1, kind: input, shape index: {}]
  %s2 = inlined_call_operand.vmem [shape: f32[1,64], index: 2, kind: input, shape index: {}]
  %s3 = inlined_call_operand.hbm [shape: f32[32,64], index: 3, kind: output, shape index: {}]
  %s4 = sld [smem:[#allocation0]]
  $region30: #{tpu_custom_call.1} parent=0
    _
  %s6 = ssub.s32 1, %s4
  %s7 = scalar_select 0, %s6, %s4
  $region1: #{tpu_custom_call.1} parent=0
    #allocation2 [shape = 'u8[16384]{0}', space=vmem, size = 0x4000, scoped, tag = 'input window, operand 0, single buffered']
    #allocation3 [shape = 's32[1]{0}', space=sflag, size = 0x4, scoped, tag = 'scoped memory for tpu_custom_call.1']
    #allocation4 [shape = 's32[1]{0}', space=sflag, size = 0x4, scoped, tag = 'scoped memory for tpu_custom_call.1']
    #allocation5 [shape = 'u8[32768]{0}', space=vmem, size = 0x8000, scoped, tag = 'input window, operand 1, single buffered']
    #allocation6 [shape = 's32[1]{0}', space=sflag, size = 0x4, scoped, tag = 'scoped memory for tpu_custom_call.1']
    #allocation7 [shape = 'u8[16384]{0}', space=vmem, size = 0x4000, scoped, tag = 'output window, operand 0, single buffered']
    %8 = vsyncpa [#allocation3], 0
    %9 = vsyncpa [#allocation6], 0
    %10 = vsyncpa [#allocation4], 0
    // Predicated region
    $region2: #{tpu_custom_call.1} parent=1 // pred_check
      _
    $region3: #{tpu_custom_call.1} parent=1 // pred_check_branch
      %12 = sbr.rel (0) target = $region5
    $region4: #{tpu_custom_call.1} parent=1 // pred_region
      %s14 = ssub.s32 512, 512
      %15 = vsyncadd [#allocation3], %s14
      %s16 = sshll.u32 [#allocation2], 4
      %s17 = int_to_ptr.vmem [resolvable:$true] %s16
      %22 = dma.hbm_to_vmem [thread:$0]  %s0, 512, %s17, [#allocation3], 128, 128, 8
    $region5: #{tpu_custom_call.1} parent=1 // pred_fallthru
      _
    // Predicated region
    $region6: #{tpu_custom_call.1} parent=1 // pred_check
      _
    $region7: #{tpu_custom_call.1} parent=1 // pred_check_branch
      %24 = sbr.rel (0) target = $region9
    $region8: #{tpu_custom_call.1} parent=1 // pred_region
      %s26 = ssub.s32 1024, 1024
      %27 = vsyncadd [#allocation6], %s26
      %s28 = sshll.u32 [#allocation5], 4
      %s29 = int_to_ptr.vmem [resolvable:$true] %s28
      %34 = dma.hbm_to_vmem [thread:$0]  %s1, 1024, %s29, [#allocation6], 128, 128, 8
    $region9: #{tpu_custom_call.1} parent=1 // pred_fallthru
      _
    // Predicated region
    $region10: #{tpu_custom_call.1} parent=1 // pred_check
      _
    $region11: #{tpu_custom_call.1} parent=1 // pred_check_branch
      %36 = sbr.rel (0) target = $region13
    $region12: #{tpu_custom_call.1} parent=1 // pred_region
      _
    $region13: #{tpu_custom_call.1} parent=1 // pred_fallthru
      _
    // Predicated region
    $region14: #{tpu_custom_call.1} parent=1 // pred_check
      _
    $region15: #{tpu_custom_call.1} parent=1 // pred_check_branch
      %38 = sbr.rel (0) target = $region17
    $region16: #{tpu_custom_call.1} parent=1 // pred_region
      %39 = dma.done [#allocation3], 512
    $region17: #{tpu_custom_call.1} parent=1 // pred_fallthru
      _
    // Predicated region
    $region18: #{tpu_custom_call.1} parent=1 // pred_check
      _
    $region19: #{tpu_custom_call.1} parent=1 // pred_check_branch
      %41 = sbr.rel (0) target = $region21
    $region20: #{tpu_custom_call.1} parent=1 // pred_region
      %42 = dma.done [#allocation6], 1024
    $region21: #{tpu_custom_call.1} parent=1 // pred_fallthru
      _
    %v43 = vld [vmem:[#allocation2] sm:$0xff]
    %v44 = vld [vmem:[#allocation2 + $0x8] sm:$0xff]
    %v45 = vld [vmem:[#allocation2 + $0x10] sm:$0xff]
    %v46 = vld [vmem:[#allocation2 + $0x18] sm:$0xff]
    %v47 = vld [vmem:[#allocation5] sm:$0xff]
    %v48 = vld [vmem:[#allocation5 + $0x8] sm:$0xff]
    %v49 = vld [vmem:[#allocation5 + $0x10] sm:$0xff]
    %v50 = vld [vmem:[#allocation5 + $0x18] sm:$0xff]
    %v51 = vld [vmem:[#allocation5 + $0x20] sm:$0xff]
    %v52 = vld [vmem:[#allocation5 + $0x28] sm:$0xff]
    %v53 = vld [vmem:[#allocation5 + $0x30] sm:$0xff]
    %v54 = vld [vmem:[#allocation5 + $0x38] sm:$0xff]
    %v55 = vld [vmem:[%s2] sm:$0x1]
    %v57 = vlaneseq
    %v58 = vshrl.u32 %v57, 7
    %v59 = vsub.s32 0, %v58
    %v60 = vrot.slane %v55, %v59
    %vm62 = vcmask 523264
    %v64 = vsel %vm62, %v43, 0
    %v67 = vsel %vm62, %v44, 0
    %v70 = vsel %vm62, %v45, 0
    %v73 = vsel %vm62, %v46, 0
    %v76 = vsel %vm62, %v47, 0
    %v79 = vsel %vm62, %v48, 0
    %v82 = vsel %vm62, %v49, 0
    %v85 = vsel %vm62, %v50, 0
    %v88 = vsel %vm62, %v51, 0
    %v91 = vsel %vm62, %v52, 0
    %v94 = vsel %vm62, %v53, 0
    %v97 = vsel %vm62, %v54, 0
    %99 = vmatprep.subr.mxu0 0.0
    %100 = vmatpush1.xpose.msra.mxu0 0.0
    %101 = vmatprep.subr.mxu0 0.0
    %102 = vmatpush1.xpose.msra.mxu0 0.0
    %103 = vmatprep.subr.mxu0 0.0
    %104 = vmatpush1.xpose.msra.mxu0 0.0
    %105 = vmatprep.subr.mxu0 0.0
    %106 = vmatpush1.xpose.msra.mxu0 0.0
    %107 = vmatprep.subr.mxu0 0.0
    %108 = vmatpush1.xpose.msra.mxu0 0.0
    %109 = vmatprep.subr.mxu0 0.0
    %110 = vmatpush1.xpose.msra.mxu0 0.0
    %111 = vmatprep.subr.mxu0 0.0
    %112 = vmatpush1.xpose.msra.mxu0 0.0
    %113 = vmatprep.subr.mxu0 0.0
    %114 = vmatpush1.xpose.msra.mxu0 0.0
    %115 = vmatprep.subr.mxu0 0.0
    %116 = vmatpush1.xpose.msra.mxu0 %v97
    %117 = vmatprep.subr.mxu0 0.0
    %118 = vmatpush1.xpose.msra.mxu0 %v94
    %119 = vmatprep.subr.mxu0 0.0
    %120 = vmatpush1.xpose.msra.mxu0 %v91
    %121 = vmatprep.subr.mxu0 0.0
    %122 = vmatpush1.xpose.msra.mxu0 %v88
    %123 = vmatprep.subr.mxu0 0.0
    %124 = vmatpush1.xpose.msra.mxu0 %v85
    %125 = vmatprep.subr.mxu0 0.0
    %126 = vmatpush1.xpose.msra.mxu0 %v82
    %127 = vmatprep.subr.mxu0 0.0
    %128 = vmatpush1.xpose.msra.mxu0 %v79
    %129 = vmatprep.subr.mxu0 0.0
    %130 = vmatpush1.xpose.msra.mxu0 %v76
    %131 = vmatprep.subr.mxu0 0.0
    %132 = vmatpush2.xpose.msra.mxu0 0.0
    %133 = vmatprep.subr.mxu0 0.0
    %134 = vmatpush2.xpose.msra.mxu0 0.0
    %135 = vmatprep.subr.mxu0 0.0
    %136 = vmatpush2.xpose.msra.mxu0 0.0
    %137 = vmatprep.subr.mxu0 0.0
    %138 = vmatpush2.xpose.msra.mxu0 0.0
    %139 = vmatprep.subr.mxu0 0.0
    %140 = vmatpush2.xpose.msra.mxu0 0.0
    %141 = vmatprep.subr.mxu0 0.0
    %142 = vmatpush2.xpose.msra.mxu0 0.0
    %143 = vmatprep.subr.mxu0 0.0
    %144 = vmatpush2.xpose.msra.mxu0 0.0
    %145 = vmatprep.subr.mxu0 0.0
    %146 = vmatpush2.xpose.msra.mxu0 0.0
    %147 = vmatprep.subr.mxu0 0.0
    %148 = vmatpush2.xpose.msra.mxu0 0.0
    %149 = vmatprep.subr.mxu0 0.0
    %150 = vmatpush2.xpose.msra.mxu0 0.0
    %151 = vmatprep.subr.mxu0 0.0
    %152 = vmatpush2.xpose.msra.mxu0 0.0
    %153 = vmatprep.subr.mxu0 0.0
    %154 = vmatpush2.xpose.msra.mxu0 0.0
    %155 = vmatprep.subr.mxu0 0.0
    %156 = vmatpush2.xpose.msra.mxu0 0.0
    %157 = vmatprep.subr.mxu0 0.0
    %158 = vmatpush2.xpose.msra.mxu0 0.0
    %159 = vmatprep.subr.mxu0 0.0
    %160 = vmatpush2.xpose.msra.mxu0 0.0
    %161 = vmatprep.subr.mxu0 0.0
    %162 = vmatpush2.xpose.msra.mxu0 0.0
    %163 = vmatprep.mubr.f32.mxu0 0.0
    %164 = vmatmul.mubr.f32.gmra.mxu0 %v64
    %v165 = vpop.f32.mrf.mxu0
    %v166 = vadd.f32 %v60, %v165
    %v167 = vpop.f32.mrf.mxu0
    %168 = vmatprep.mubr.f32.mxu0 0.0
    %169 = vmatmul.mubr.f32.gmra.mxu0 %v67
    %v170 = vpop.f32.mrf.mxu0
    %v171 = vadd.f32 %v60, %v170
    %v172 = vpop.f32.mrf.mxu0
    %173 = vmatprep.mubr.f32.mxu0 0.0
    %174 = vmatmul.mubr.f32.gmra.mxu0 %v70
    %v175 = vpop.f32.mrf.mxu0
    %v176 = vadd.f32 %v60, %v175
    %v177 = vpop.f32.mrf.mxu0
    %178 = vmatprep.mubr.f32.mxu0 0.0
    %179 = vmatmul.mubr.f32.gmra.mxu0 %v73
    %v180 = vpop.f32.mrf.mxu0
    %v181 = vadd.f32 %v60, %v180
    %v182 = vpop.f32.mrf.mxu0
    %183 = vdwg.mxu0
    %184 = vst.msk [vmem:[#allocation7] sm:$0xff] %vm62, %v166
    %185 = vst.msk [vmem:[#allocation7 + $0x8] sm:$0xff] %vm62, %v171
    %186 = vst.msk [vmem:[#allocation7 + $0x10] sm:$0xff] %vm62, %v176
    %187 = vst.msk [vmem:[#allocation7 + $0x18] sm:$0xff] %vm62, %v181
    // Predicated region
    $region22: #{tpu_custom_call.1} parent=1 // pred_check
      _
    $region23: #{tpu_custom_call.1} parent=1 // pred_check_branch
      %189 = sbr.rel (0) target = $region25
    $region24: #{tpu_custom_call.1} parent=1 // pred_region
      %s191 = ssub.s32 512, 512
      %192 = vsyncadd [#allocation4], %s191
      %s193 = sshll.u32 [#allocation7], 4
      %s194 = int_to_ptr.vmem [resolvable:$true] %s193
      %199 = dma.vmem_to_hbm [thread:$0]  %s194, 512, %s3, [#allocation4], 128, 128, 8
    $region25: #{tpu_custom_call.1} parent=1 // pred_fallthru
      _
    // Predicated region
    $region26: #{tpu_custom_call.1} parent=1 // pred_check
      _
    $region27: #{tpu_custom_call.1} parent=1 // pred_check_branch
      %201 = sbr.rel (0) target = $region29
    $region28: #{tpu_custom_call.1} parent=1 // pred_region
      %202 = dma.done [#allocation4], 512
    $region29: #{tpu_custom_call.1} parent=1 // pred_fallthru
      _
    %203 = vsyncpa [#allocation3], 1
    %204 = vsyncpa [#allocation6], 1
    %205 = vsyncpa [#allocation4], 1

</llo_original>
